<compile_context>
chip_gen: v5e
topology: v5e:2x2
jax: 0.10.0
libtpu: 0.0.40
codegen_flags: <defaults>
</compile_context>

<pallas_src>
import functools

import jax
import jax.numpy as jnp
from jax.experimental import pallas as pl
from jax.experimental.pallas import tpu as pltpu


def _round_up(n, m):
    return ((n + m - 1) // m) * m


def _actor_kernel(x_ref, w1_ref, b1_ref, w2_ref, b2_ref, w3_ref, b3_ref, o_ref,
                  *, actions_dim, compute_dtype):
    # Three MXU matmuls + VPU ReLUs + row-wise numerically-stable softmax, all in VMEM.
    x = x_ref[...].astype(compute_dtype)      # in-kernel cast (no-op for f32)

    h1 = jnp.dot(x, w1_ref[...], preferred_element_type=jnp.float32) + b1_ref[...]
    h1 = jnp.maximum(h1, 0.0).astype(compute_dtype)

    h2 = jnp.dot(h1, w2_ref[...], preferred_element_type=jnp.float32) + b2_ref[...]
    h2 = jnp.maximum(h2, 0.0).astype(compute_dtype)

    # b3 has -1e30 baked into the padded action lanes, so exp(logit - max) underflows
    # to 0 there and the softmax denominator is exact over the real actions.
    logits = jnp.dot(h2, w3_ref[...], preferred_element_type=jnp.float32) + b3_ref[...]

    m = jnp.max(logits, axis=-1, keepdims=True)
    e = jnp.exp(logits - m)
    denom = jnp.sum(e, axis=-1, keepdims=True)
    # Exact reciprocal keeps row sums within 1e-5 (approx=True would be ~1e-3).
    probs = e[:, :actions_dim] * pl.reciprocal(denom, approx=False)
    o_ref[...] = probs.astype(o_ref.dtype)


def prepare_actor_params(params, *, compute_dtype=jnp.float32):
    """One-time prep: pad weights/biases to lane-dense (multiple-of-128) widths and bake
    the padded-action mask into b3. Hoisted out of the per-call path."""
    w1, b1 = params["w1"], params["b1"]
    w2, b2 = params["w2"], params["b2"]
    w3, b3 = params["w3"], params["b3"]

    S = w1.shape[0]
    A = w3.shape[1]
    H1 = _round_up(w1.shape[1], 128)   # 30 -> 128
    H2 = _round_up(w2.shape[1], 128)   # 50 -> 128
    AP = _round_up(A, 128)             # A  -> 128

    # Zero-padded columns produce 0 pre-ReLU; zero-padded rows multiply 0-activations.
    w1p = jnp.zeros((S, H1), compute_dtype).at[:, : w1.shape[1]].set(w1.astype(compute_dtype))
    b1p = jnp.zeros((1, H1), jnp.float32).at[:, : b1.shape[1]].set(b1)
    w2p = jnp.zeros((H1, H2), compute_dtype).at[: w2.shape[0], : w2.shape[1]].set(w2.astype(compute_dtype))
    b2p = jnp.zeros((1, H2), jnp.float32).at[:, : b2.shape[1]].set(b2)
    w3p = jnp.zeros((H2, AP), compute_dtype).at[: w3.shape[0], : A].set(w3.astype(compute_dtype))
    # Padded action lanes get -1e30 so they never perturb the softmax denominator.
    b3p = jnp.full((1, AP), -1e30, jnp.float32).at[:, : A].set(b3)

    return {
        "w1p": w1p, "b1p": b1p, "w2p": w2p, "b2p": b2p, "w3p": w3p, "b3p": b3p,
        "states_dim": S, "actions_dim": A, "compute_dtype": compute_dtype,
    }


def actor_forward(x, prepared, *, block_b=1024):
    """x: (B, states_dim) float32. prepared: output of prepare_actor_params."""
    B, S = x.shape
    assert S == prepared["states_dim"]
    A = prepared["actions_dim"]
    compute_dtype = prepared["compute_dtype"]

    w1p, b1p = prepared["w1p"], prepared["b1p"]
    w2p, b2p = prepared["w2p"], prepared["b2p"]
    w3p, b3p = prepared["w3p"], prepared["b3p"]
    H1, H2, AP = w1p.shape[1], w2p.shape[1], w3p.shape[1]

    # Batch tile: large enough to amortize the ~0.35us/step overhead, clamped so big
    # batches still give >=4 grid steps (feeds both v7x TensorCores with room to
    # overlap DMA/compute); sublane-aligned (multiple of 8). VMEM is not a constraint
    # at these sizes (a few MiB per step, well under the 16/32 MiB scoped defaults).
    TB = max(8, min(block_b, _round_up(pl.cdiv(B, 4), 8)))
    grid = (pl.cdiv(B, TB),)   # trailing partial block: OOB reads are garbage rows whose
                               # writes are discarded (softmax is row-wise, so no leakage)

    kernel = functools.partial(_actor_kernel, actions_dim=A, compute_dtype=compute_dtype)

    out = pl.pallas_call(
        kernel,
        out_shape=jax.ShapeDtypeStruct((B, A), jnp.float32),
        grid=grid,
        in_specs=[
            pl.BlockSpec((TB, S), lambda i: (i, 0)),    # streamed, double-buffered x tile
            pl.BlockSpec((S, H1), lambda i: (0, 0)),    # weights stay VMEM-resident
            pl.BlockSpec((1, H1), lambda i: (0, 0)),
            pl.BlockSpec((H1, H2), lambda i: (0, 0)),
            pl.BlockSpec((1, H2), lambda i: (0, 0)),
            pl.BlockSpec((H2, AP), lambda i: (0, 0)),
            pl.BlockSpec((1, AP), lambda i: (0, 0)),
        ],
        # Unpadded output: last block dim equals the full array dim, HBM DMA is contiguous
        # and only the useful bytes ever leave the chip.
        out_specs=pl.BlockSpec((TB, A), lambda i: (i, 0)),
        compiler_params=pltpu.CompilerParams(
            dimension_semantics=("parallel",),   # only pays off on v7x (2 TCs); harmless elsewhere
        ),
    )(x, w1p, b1p, w2p, b2p, w3p, b3p)

    return out


def init_actor_params(key, actions_dim, states_dim):
    """PyTorch nn.Linear-style init (uniform +/- 1/sqrt(fan_in)); weights stored as (in, out)."""
    ks = jax.random.split(key, 6)

    def lin(kw, kb, fan_in, fan_out):
        bound = 1.0 / jnp.sqrt(jnp.float32(fan_in))
        w = jax.random.uniform(kw, (fan_in, fan_out), jnp.float32, -bound, bound)
        b = jax.random.uniform(kb, (1, fan_out), jnp.float32, -bound, bound)
        return w, b

    w1, b1 = lin(ks[0], ks[1], states_dim, 30)
    w2, b2 = lin(ks[2], ks[3], 30, 50)
    w3, b3 = lin(ks[4], ks[5], 50, actions_dim)
    return {"w1": w1, "b1": b1, "w2": w2, "b2": b2, "w3": w3, "b3": b3}


def actor_reference(x, p):
    h1 = jax.nn.relu(x @ p["w1"] + p["b1"])
    h2 = jax.nn.relu(h1 @ p["w2"] + p["b2"])
    logits = h2 @ p["w3"] + p["b3"]
    return jax.nn.softmax(logits, axis=-1)


if __name__ == "__main__":
    key = jax.random.PRNGKey(0)
    k_x, k_p = jax.random.split(key)

    batch = 2
    states_dim = 32
    actions_dim = 8

    x = jax.random.normal(k_x, (batch, states_dim), jnp.float32)
    params = init_actor_params(k_p, actions_dim, states_dim)
    prepared = prepare_actor_params(params)   # one-time weight padding / mask baking

    out = jax.block_until_ready(actor_forward(x, prepared))
    ref = actor_reference(x, params)
    assert out.shape == (batch, actions_dim)
    assert jnp.allclose(out, ref, atol=1e-5, rtol=1e-5), "mismatch vs reference"
    assert jnp.allclose(jnp.sum(out, axis=-1), 1.0, atol=1e-5), "rows must sum to 1"

    # Exercise the tiled/pipelined path with a larger, non-multiple batch (partial last block).
    big_x = jax.random.normal(k_x, (1000, states_dim), jnp.float32)
    big_out = jax.block_until_ready(actor_forward(big_x, prepared, block_b=1024))
    big_ref = actor_reference(big_x, params)
    assert big_out.shape == (1000, actions_dim)
    assert jnp.allclose(big_out, big_ref, atol=1e-5, rtol=1e-5), "mismatch (large batch)"
    assert jnp.allclose(jnp.sum(big_out, axis=-1), 1.0, atol=1e-5), "rows must sum to 1 (large)"

    print("KERNEL_OK")
</pallas_src>

<mosaic_0001>
module attributes {stable_mosaic.version = 11 : i64} {
  func.func @_actor_kernel(%arg0: i32, %arg1: memref<8x32xf32, #tpu.memory_space<vmem>>, %arg2: memref<32x128xf32, #tpu.memory_space<vmem>>, %arg3: memref<1x128xf32, #tpu.memory_space<vmem>>, %arg4: memref<128x128xf32, #tpu.memory_space<vmem>>, %arg5: memref<1x128xf32, #tpu.memory_space<vmem>>, %arg6: memref<128x128xf32, #tpu.memory_space<vmem>>, %arg7: memref<1x128xf32, #tpu.memory_space<vmem>>, %arg8: memref<8x8xf32, #tpu.memory_space<vmem>>) attributes {dimension_semantics = [#tpu.dimension_semantics<parallel>], iteration_bounds = array<i64: 1>, scalar_prefetch = 0 : i64, scratch_operands = 0 : i64, tpu.core_type = #tpu.core_type<tc>, window_params = [{transform_indices = @transform_0, window_bounds = array<i64: 8, 32>}, {pipeline_mode = #tpu.pipeline_mode<synchronous>, transform_indices = @transform_1, window_bounds = array<i64: 32, 128>}, {pipeline_mode = #tpu.pipeline_mode<synchronous>, transform_indices = @transform_2, window_bounds = array<i64: 1, 128>}, {pipeline_mode = #tpu.pipeline_mode<synchronous>, transform_indices = @transform_3, window_bounds = array<i64: 128, 128>}, {pipeline_mode = #tpu.pipeline_mode<synchronous>, transform_indices = @transform_4, window_bounds = array<i64: 1, 128>}, {pipeline_mode = #tpu.pipeline_mode<synchronous>, transform_indices = @transform_5, window_bounds = array<i64: 128, 128>}, {pipeline_mode = #tpu.pipeline_mode<synchronous>, transform_indices = @transform_6, window_bounds = array<i64: 1, 128>}, {transform_indices = @transform_7, window_bounds = array<i64: 8, 8>}]} {
    %c0 = arith.constant 0 : index
    %c0_0 = arith.constant 0 : index
    %0 = vector.load %arg1[%c0, %c0_0] : memref<8x32xf32, #tpu.memory_space<vmem>>, vector<8x32xf32>
    %c0_1 = arith.constant 0 : index
    %c0_2 = arith.constant 0 : index
    %1 = vector.load %arg2[%c0_1, %c0_2] : memref<32x128xf32, #tpu.memory_space<vmem>>, vector<32x128xf32>
    %cst = arith.constant dense<0.000000e+00> : vector<8x128xf32>
    %2 = tpu.matmul %0, %1, %cst {dimension_numbers = #tpu.dot_dimension_numbers<[1], [0], [0], [1], [0, 0, 1, 1], [], []>} : vector<8x32xf32>, vector<32x128xf32>, vector<8x128xf32> -> vector<8x128xf32>
    %c0_3 = arith.constant 0 : index
    %c0_4 = arith.constant 0 : index
    %3 = vector.load %arg3[%c0_3, %c0_4] : memref<1x128xf32, #tpu.memory_space<vmem>>, vector<1x128xf32>
    %4 = vector.broadcast %3 : vector<1x128xf32> to vector<8x128xf32>
    %5 = arith.addf %2, %4 : vector<8x128xf32>
    %cst_5 = arith.constant 0.000000e+00 : f32
    %6 = vector.broadcast %cst_5 : f32 to vector<8x128xf32>
    %7 = arith.maximumf %5, %6 : vector<8x128xf32>
    %c0_6 = arith.constant 0 : index
    %c0_7 = arith.constant 0 : index
    %8 = vector.load %arg4[%c0_6, %c0_7] : memref<128x128xf32, #tpu.memory_space<vmem>>, vector<128x128xf32>
    %cst_8 = arith.constant dense<0.000000e+00> : vector<8x128xf32>
    %9 = tpu.matmul %7, %8, %cst_8 {dimension_numbers = #tpu.dot_dimension_numbers<[1], [0], [0], [1], [0, 0, 1, 1], [], []>} : vector<8x128xf32>, vector<128x128xf32>, vector<8x128xf32> -> vector<8x128xf32>
    %c0_9 = arith.constant 0 : index
    %c0_10 = arith.constant 0 : index
    %10 = vector.load %arg5[%c0_9, %c0_10] : memref<1x128xf32, #tpu.memory_space<vmem>>, vector<1x128xf32>
    %11 = vector.broadcast %10 : vector<1x128xf32> to vector<8x128xf32>
    %12 = arith.addf %9, %11 : vector<8x128xf32>
    %cst_11 = arith.constant 0.000000e+00 : f32
    %13 = vector.broadcast %cst_11 : f32 to vector<8x128xf32>
    %14 = arith.maximumf %12, %13 : vector<8x128xf32>
    %c0_12 = arith.constant 0 : index
    %c0_13 = arith.constant 0 : index
    %15 = vector.load %arg6[%c0_12, %c0_13] : memref<128x128xf32, #tpu.memory_space<vmem>>, vector<128x128xf32>
    %cst_14 = arith.constant dense<0.000000e+00> : vector<8x128xf32>
    %16 = tpu.matmul %14, %15, %cst_14 {dimension_numbers = #tpu.dot_dimension_numbers<[1], [0], [0], [1], [0, 0, 1, 1], [], []>} : vector<8x128xf32>, vector<128x128xf32>, vector<8x128xf32> -> vector<8x128xf32>
    %c0_15 = arith.constant 0 : index
    %c0_16 = arith.constant 0 : index
    %17 = vector.load %arg7[%c0_15, %c0_16] : memref<1x128xf32, #tpu.memory_space<vmem>>, vector<1x128xf32>
    %18 = vector.broadcast %17 : vector<1x128xf32> to vector<8x128xf32>
    %19 = arith.addf %16, %18 : vector<8x128xf32>
    %cst_17 = arith.constant dense<0xFF800000> : vector<8xf32>
    %20 = vector.multi_reduction <maximumf>, %19, %cst_17 [1] : vector<8x128xf32> to vector<8xf32>
    %21 = vector.shape_cast %20 : vector<8xf32> to vector<8x1xf32>
    %22 = vector.broadcast %21 : vector<8x1xf32> to vector<8x128xf32>
    %23 = arith.subf %19, %22 : vector<8x128xf32>
    %24 = math.exp %23 : vector<8x128xf32>
    %cst_18 = arith.constant dense<0.000000e+00> : vector<8xf32>
    %25 = vector.multi_reduction <add>, %24, %cst_18 [1] : vector<8x128xf32> to vector<8xf32>
    %26 = vector.shape_cast %25 : vector<8xf32> to vector<8x1xf32>
    %27 = vector.extract_strided_slice %24 {offsets = [0, 0], sizes = [8, 8], strides = [1, 1]} : vector<8x128xf32> to vector<8x8xf32>
    %28 = tpu.reciprocal %26 : vector<8x1xf32> -> vector<8x1xf32>
    %29 = vector.broadcast %28 : vector<8x1xf32> to vector<8x8xf32>
    %30 = arith.mulf %27, %29 : vector<8x8xf32>
    %c0_19 = arith.constant 0 : index
    %c0_20 = arith.constant 0 : index
    %31 = vector.load %arg8[%c0_19, %c0_20] : memref<8x8xf32, #tpu.memory_space<vmem>>, vector<8x8xf32>
    tpu.vector_store %arg8[%c0_19, %c0_20], %30 {strides = array<i32>} : memref<8x8xf32, #tpu.memory_space<vmem>>, vector<8x8xf32>,
    return
  }
  func.func @transform_0(%arg0: i32) -> (i32, i32) {
    %c0_i32 = arith.constant 0 : i32
    %c0_i32_0 = arith.constant 0 : i32
    return %arg0, %c0_i32 : i32, i32
  }
  func.func @transform_1(%arg0: i32) -> (i32, i32) {
    %c0_i32 = arith.constant 0 : i32
    %c0_i32_0 = arith.constant 0 : i32
    %c0_i32_1 = arith.constant 0 : i32
    return %c0_i32, %c0_i32_0 : i32, i32
  }
  func.func @transform_2(%arg0: i32) -> (i32, i32) {
    %c0_i32 = arith.constant 0 : i32
    %c0_i32_0 = arith.constant 0 : i32
    %c0_i32_1 = arith.constant 0 : i32
    return %c0_i32, %c0_i32_0 : i32, i32
  }
  func.func @transform_3(%arg0: i32) -> (i32, i32) {
    %c0_i32 = arith.constant 0 : i32
    %c0_i32_0 = arith.constant 0 : i32
    %c0_i32_1 = arith.constant 0 : i32
    return %c0_i32, %c0_i32_0 : i32, i32
  }
  func.func @transform_4(%arg0: i32) -> (i32, i32) {
    %c0_i32 = arith.constant 0 : i32
    %c0_i32_0 = arith.constant 0 : i32
    %c0_i32_1 = arith.constant 0 : i32
    return %c0_i32, %c0_i32_0 : i32, i32
  }
  func.func @transform_5(%arg0: i32) -> (i32, i32) {
    %c0_i32 = arith.constant 0 : i32
    %c0_i32_0 = arith.constant 0 : i32
    %c0_i32_1 = arith.constant 0 : i32
    return %c0_i32, %c0_i32_0 : i32, i32
  }
  func.func @transform_6(%arg0: i32) -> (i32, i32) {
    %c0_i32 = arith.constant 0 : i32
    %c0_i32_0 = arith.constant 0 : i32
    %c0_i32_1 = arith.constant 0 : i32
    return %c0_i32, %c0_i32_0 : i32, i32
  }
  func.func @transform_7(%arg0: i32) -> (i32, i32) {
    %c0_i32 = arith.constant 0 : i32
    %c0_i32_0 = arith.constant 0 : i32
    return %arg0, %c0_i32 : i32, i32
  }
}

</mosaic_0001>

<llo_original>
// kernel: tpu_custom_call.1
$region0: #{tpu_custom_call.1}
  #allocation0 [shape = 'u32[]', space=smem, size = 0x4, offset = 0x4, fixed_abs, tag = 'smem constant byte address 0x4 - core index']
  #allocation1 [shape = 'u32[72,128]{1,0:T(1,128)}', space=vmem, size = 0x9000, scoped, tag = 'internal scratch']
  %s0 = inlined_call_operand.hbm [shape: f32[2,32], index: 0, kind: input, shape index: {}]
  %s1 = inlined_call_operand.hbm [shape: f32[32,128], index: 1, kind: input, shape index: {}]
  %s2 = inlined_call_operand.vmem [shape: f32[1,128], index: 2, kind: input, shape index: {}]
  %s3 = inlined_call_operand.hbm [shape: f32[128,128], index: 3, kind: input, shape index: {}]
  %s4 = inlined_call_operand.vmem [shape: f32[1,128], index: 4, kind: input, shape index: {}]
  %s5 = inlined_call_operand.hbm [shape: f32[128,128], index: 5, kind: input, shape index: {}]
  %s6 = inlined_call_operand.vmem [shape: f32[1,128], index: 6, kind: input, shape index: {}]
  %s7 = inlined_call_operand.hbm [shape: f32[2,8], index: 7, kind: output, shape index: {}]
  %s8 = sld [smem:[#allocation0]]
  $region54: #{tpu_custom_call.1} parent=0
    _
  %s10 = ssub.s32 1, %s8
  %s11 = scalar_select 0, %s10, %s8
  $region1: #{tpu_custom_call.1} parent=0
    #allocation2 [shape = 'u8[4096]{0}', space=vmem, size = 0x1000, scoped, tag = 'input window, operand 0, single buffered']
    #allocation3 [shape = 's32[1]{0}', space=sflag, size = 0x4, scoped, tag = 'scoped memory for tpu_custom_call.1']
    #allocation4 [shape = 's32[1]{0}', space=sflag, size = 0x4, scoped, tag = 'scoped memory for tpu_custom_call.1']
    #allocation5 [shape = 'u8[16384]{0}', space=vmem, size = 0x4000, scoped, tag = 'input window, operand 1, single buffered']
    #allocation6 [shape = 's32[1]{0}', space=sflag, size = 0x4, scoped, tag = 'scoped memory for tpu_custom_call.1']
    #allocation7 [shape = 'u8[65536]{0}', space=vmem, size = 0x10000, scoped, tag = 'input window, operand 3, single buffered']
    #allocation8 [shape = 'u8[65536]{0}', space=vmem, size = 0x10000, scoped, tag = 'input window, operand 5, single buffered']
    #allocation9 [shape = 's32[1]{0}', space=sflag, size = 0x4, scoped, tag = 'scoped memory for tpu_custom_call.1']
    #allocation10 [shape = 'u8[4096]{0}', space=vmem, size = 0x1000, scoped, tag = 'output window, operand 0, single buffered']
    %12 = vsyncpa [#allocation3], 0
    %13 = vsyncpa [#allocation6], 0
    %14 = vsyncpa [#allocation9], 0
    %15 = vsyncpa [#allocation4], 0
    // Predicated region
    $region2: #{tpu_custom_call.1} parent=1 // pred_check
      _
    $region3: #{tpu_custom_call.1} parent=1 // pred_check_branch
      %17 = sbr.rel (0) target = $region5
    $region4: #{tpu_custom_call.1} parent=1 // pred_region
      %19 = vsyncadd [#allocation3], 96
      %s20 = sshll.u32 %s0, 4
      %s21 = int_to_ptr.hbm [resolvable:$true] %s20
      %s22 = sshll.u32 [#allocation2], 4
      %s23 = int_to_ptr.vmem [resolvable:$true] %s22
      %28 = dma.hbm_to_vmem [thread:$0]  %s21, 32, %s23, [#allocation3], 32, 32, 2
    $region5: #{tpu_custom_call.1} parent=1 // pred_fallthru
      _
    // Predicated region
    $region6: #{tpu_custom_call.1} parent=1 // pred_check
      _
    $region7: #{tpu_custom_call.1} parent=1 // pred_check_branch
      %30 = sbr.rel (0) target = $region9
    $region8: #{tpu_custom_call.1} parent=1 // pred_region
      %32 = vsyncadd [#allocation6], 0
      %s33 = sshll.u32 %s1, 4
      %s34 = int_to_ptr.hbm [resolvable:$true] %s33
      %s35 = sshll.u32 [#allocation5], 4
      %s36 = int_to_ptr.vmem [resolvable:$true] %s35
      %41 = dma.hbm_to_vmem [thread:$0]  %s34, 512, %s36, [#allocation6], 128, 128, 8
    $region9: #{tpu_custom_call.1} parent=1 // pred_fallthru
      _
    // Predicated region
    $region10: #{tpu_custom_call.1} parent=1 // pred_check
      _
    $region11: #{tpu_custom_call.1} parent=1 // pred_check_branch
      %43 = sbr.rel (0) target = $region13
    $region12: #{tpu_custom_call.1} parent=1 // pred_region
      _
    $region13: #{tpu_custom_call.1} parent=1 // pred_fallthru
      _
    // Predicated region
    $region14: #{tpu_custom_call.1} parent=1 // pred_check
      _
    $region15: #{tpu_custom_call.1} parent=1 // pred_check_branch
      %45 = sbr.rel (0) target = $region17
    $region16: #{tpu_custom_call.1} parent=1 // pred_region
      %47 = vsyncadd [#allocation6], 0
      %s48 = sshll.u32 %s3, 4
      %s49 = int_to_ptr.hbm [resolvable:$true] %s48
      %s50 = sshll.u32 [#allocation7], 4
      %s51 = int_to_ptr.vmem [resolvable:$true] %s50
      %56 = dma.hbm_to_vmem [thread:$0]  %s49, 2048, %s51, [#allocation6], 128, 128, 8
    $region17: #{tpu_custom_call.1} parent=1 // pred_fallthru
      _
    // Predicated region
    $region18: #{tpu_custom_call.1} parent=1 // pred_check
      _
    $region19: #{tpu_custom_call.1} parent=1 // pred_check_branch
      %58 = sbr.rel (0) target = $region21
    $region20: #{tpu_custom_call.1} parent=1 // pred_region
      _
    $region21: #{tpu_custom_call.1} parent=1 // pred_fallthru
      _
    // Predicated region
    $region22: #{tpu_custom_call.1} parent=1 // pred_check
      _
    $region23: #{tpu_custom_call.1} parent=1 // pred_check_branch
      %60 = sbr.rel (0) target = $region25
    $region24: #{tpu_custom_call.1} parent=1 // pred_region
      %62 = vsyncadd [#allocation9], 0
      %s63 = sshll.u32 %s5, 4
      %s64 = int_to_ptr.hbm [resolvable:$true] %s63
      %s65 = sshll.u32 [#allocation8], 4
      %s66 = int_to_ptr.vmem [resolvable:$true] %s65
      %71 = dma.hbm_to_vmem [thread:$0]  %s64, 2048, %s66, [#allocation9], 128, 128, 8
    $region25: #{tpu_custom_call.1} parent=1 // pred_fallthru
      _
    // Predicated region
    $region26: #{tpu_custom_call.1} parent=1 // pred_check
      _
    $region27: #{tpu_custom_call.1} parent=1 // pred_check_branch
      %73 = sbr.rel (0) target = $region29
    $region28: #{tpu_custom_call.1} parent=1 // pred_region
      _
    $region29: #{tpu_custom_call.1} parent=1 // pred_fallthru
      _
    // Predicated region
    $region30: #{tpu_custom_call.1} parent=1 // pred_check
      _
    $region31: #{tpu_custom_call.1} parent=1 // pred_check_branch
      %75 = sbr.rel (0) target = $region33
    $region32: #{tpu_custom_call.1} parent=1 // pred_region
      %77 = dma.done [#allocation3], 128
    $region33: #{tpu_custom_call.1} parent=1 // pred_fallthru
      _
    // Predicated region
    $region34: #{tpu_custom_call.1} parent=1 // pred_check
      _
    $region35: #{tpu_custom_call.1} parent=1 // pred_check_branch
      %79 = sbr.rel (0) target = $region37
    $region36: #{tpu_custom_call.1} parent=1 // pred_region
      %81 = dma.done [#allocation6], 512
    $region37: #{tpu_custom_call.1} parent=1 // pred_fallthru
      _
    // Predicated region
    $region38: #{tpu_custom_call.1} parent=1 // pred_check
      _
    $region39: #{tpu_custom_call.1} parent=1 // pred_check_branch
      %83 = sbr.rel (0) target = $region41
    $region40: #{tpu_custom_call.1} parent=1 // pred_region
      %85 = dma.done [#allocation6], 2048
    $region41: #{tpu_custom_call.1} parent=1 // pred_fallthru
      _
    // Predicated region
    $region42: #{tpu_custom_call.1} parent=1 // pred_check
      _
    $region43: #{tpu_custom_call.1} parent=1 // pred_check_branch
      %87 = sbr.rel (0) target = $region45
    $region44: #{tpu_custom_call.1} parent=1 // pred_region
      %89 = dma.done [#allocation9], 2048
    $region45: #{tpu_custom_call.1} parent=1 // pred_fallthru
      _
    %v90 = vld [vmem:[#allocation2] sm:$0xff]
    %v91 = vld [vmem:[#allocation5] sm:$0xff]
    %v92 = vld [vmem:[#allocation5 + $0x8] sm:$0xff]
    %v93 = vld [vmem:[#allocation5 + $0x10] sm:$0xff]
    %v94 = vld [vmem:[#allocation5 + $0x18] sm:$0xff]
    %v95 = vld [vmem:[%s2] sm:$0x1]
    %v97 = vperm.slane %v95, 0
    %vm99 = vcmask 261120
    %v101 = vsel %vm99, %v90, 0
    %103 = vmatpush.msra.mxu0 0.0
    %104 = vmatpush.msra.mxu0 0.0
    %105 = vmatpush.msra.mxu0 0.0
    %106 = vmatpush.msra.mxu0 0.0
    %107 = vmatpush.msra.mxu0 0.0
    %108 = vmatpush.msra.mxu0 0.0
    %109 = vmatpush.msra.mxu0 0.0
    %110 = vmatpush.msra.mxu0 0.0
    %111 = vmatpush.msra.mxu0 0.0
    %112 = vmatpush.msra.mxu0 0.0
    %113 = vmatpush.msra.mxu0 0.0
    %114 = vmatpush.msra.mxu0 0.0
    %115 = vmatpush.msra.mxu0 %v94
    %116 = vmatpush.msra.mxu0 %v93
    %117 = vmatpush.msra.mxu0 %v92
    %118 = vmatpush.msra.mxu0 %v91
    %119 = vmatmul.f32.gmra.mxu0 %v101
    %v120 = vpop.f32.mrf.mxu0
    %v121 = vadd.f32 %v97, %v120
    %122 = vdwg.mxu0
    %v123 = vmax.f32 %v121, 0.0
    %v124 = vld [vmem:[#allocation7] sm:$0xff]
    %v125 = vld [vmem:[#allocation7 + $0x8] sm:$0xff]
    %v126 = vld [vmem:[#allocation7 + $0x10] sm:$0xff]
    %v127 = vld [vmem:[#allocation7 + $0x18] sm:$0xff]
    %v128 = vld [vmem:[#allocation7 + $0x20] sm:$0xff]
    %v129 = vld [vmem:[#allocation7 + $0x28] sm:$0xff]
    %v130 = vld [vmem:[#allocation7 + $0x30] sm:$0xff]
    %v131 = vld [vmem:[#allocation7 + $0x38] sm:$0xff]
    %v132 = vld [vmem:[#allocation7 + $0x40] sm:$0xff]
    %v133 = vld [vmem:[#allocation7 + $0x48] sm:$0xff]
    %v134 = vld [vmem:[#allocation7 + $0x50] sm:$0xff]
    %v135 = vld [vmem:[#allocation7 + $0x58] sm:$0xff]
    %v136 = vld [vmem:[#allocation7 + $0x60] sm:$0xff]
    %v137 = vld [vmem:[#allocation7 + $0x68] sm:$0xff]
    %v138 = vld [vmem:[#allocation7 + $0x70] sm:$0xff]
    %v139 = vld [vmem:[#allocation7 + $0x78] sm:$0xff]
    %v140 = vld [vmem:[%s4] sm:$0x1]
    %v142 = vperm.slane %v140, 0
    %144 = vmatpush.msra.mxu0 %v139
    %145 = vmatpush.msra.mxu0 %v138
    %146 = vmatpush.msra.mxu0 %v137
    %147 = vmatpush.msra.mxu0 %v136
    %148 = vmatpush.msra.mxu0 %v135
    %149 = vmatpush.msra.mxu0 %v134
    %150 = vmatpush.msra.mxu0 %v133
    %151 = vmatpush.msra.mxu0 %v132
    %152 = vmatpush.msra.mxu0 %v131
    %153 = vmatpush.msra.mxu0 %v130
    %154 = vmatpush.msra.mxu0 %v129
    %155 = vmatpush.msra.mxu0 %v128
    %156 = vmatpush.msra.mxu0 %v127
    %157 = vmatpush.msra.mxu0 %v126
    %158 = vmatpush.msra.mxu0 %v125
    %159 = vmatpush.msra.mxu0 %v124
    %160 = vmatmul.f32.gmra.mxu0 %v123
    %v161 = vpop.f32.mrf.mxu0
    %v162 = vadd.f32 %v142, %v161
    %163 = vdwg.mxu0
    %v164 = vmax.f32 %v162, 0.0
    %v165 = vld [vmem:[#allocation8] sm:$0xff]
    %v166 = vld [vmem:[#allocation8 + $0x8] sm:$0xff]
    %v167 = vld [vmem:[#allocation8 + $0x10] sm:$0xff]
    %v168 = vld [vmem:[#allocation8 + $0x18] sm:$0xff]
    %v169 = vld [vmem:[#allocation8 + $0x20] sm:$0xff]
    %v170 = vld [vmem:[#allocation8 + $0x28] sm:$0xff]
    %v171 = vld [vmem:[#allocation8 + $0x30] sm:$0xff]
    %v172 = vld [vmem:[#allocation8 + $0x38] sm:$0xff]
    %v173 = vld [vmem:[#allocation8 + $0x40] sm:$0xff]
    %v174 = vld [vmem:[#allocation8 + $0x48] sm:$0xff]
    %v175 = vld [vmem:[#allocation8 + $0x50] sm:$0xff]
    %v176 = vld [vmem:[#allocation8 + $0x58] sm:$0xff]
    %v177 = vld [vmem:[#allocation8 + $0x60] sm:$0xff]
    %v178 = vld [vmem:[#allocation8 + $0x68] sm:$0xff]
    %v179 = vld [vmem:[#allocation8 + $0x70] sm:$0xff]
    %v180 = vld [vmem:[#allocation8 + $0x78] sm:$0xff]
    %v181 = vld [vmem:[%s6] sm:$0x1]
    %v183 = vperm.slane %v181, 0
    %185 = vmatpush.msra.mxu0 %v180
    %186 = vmatpush.msra.mxu0 %v179
    %187 = vmatpush.msra.mxu0 %v178
    %188 = vmatpush.msra.mxu0 %v177
    %189 = vmatpush.msra.mxu0 %v176
    %190 = vmatpush.msra.mxu0 %v175
    %191 = vmatpush.msra.mxu0 %v174
    %192 = vmatpush.msra.mxu0 %v173
    %193 = vmatpush.msra.mxu0 %v172
    %194 = vmatpush.msra.mxu0 %v171
    %195 = vmatpush.msra.mxu0 %v170
    %196 = vmatpush.msra.mxu0 %v169
    %197 = vmatpush.msra.mxu0 %v168
    %198 = vmatpush.msra.mxu0 %v167
    %199 = vmatpush.msra.mxu0 %v166
    %200 = vmatpush.msra.mxu0 %v165
    %201 = vmatmul.f32.gmra.mxu0 %v164
    %v202 = vpop.f32.mrf.mxu0
    %v203 = vadd.f32 %v183, %v202
    %204 = vdwg.mxu0
    %205 = vmax.xlane.f32.xlu0 %v203
    %v206 = vpop.xlane.xlu0 %205
    %v207 = vsub.f32 %v203, %v206
    %v208 = vmul.f32 %v207, 1.442695
    %v209 = vpow.pop %v208
    %210 = vadd.xlane.f32.xlu0 %v209
    %v211 = vpop.xlane.xlu0 %210
    %v212 = vrcp.pop %v211
    %v213 = vmul.f32 %v211, %v212
    %v214 = vsub.f32 1.0, %v213
    %v215 = vmul.f32 %v212, %v214
    %v216 = vadd.f32 %v212, %v215
    %vm217 = vweird.f32 %v211
    %vm218 = vweird.f32 %v212
    %vm219 = vmor %vm217, %vm218
    %v220 = vsel %vm219, %v212, %v216
    %v221 = vand.u32 2147483647, %v211
    %vm222 = vcmp.eq.f32.partialorder %v221, 8.507059e+37
    %v223 = vand.u32 %v211, 2147483648
    %v224 = vor.u32 1.1754944e-38, %v223
    %v225 = vsel %vm222, %v224, %v220
    %v226 = vmul.f32 %v209, %v225
    %vm227 = vcmask 64512
    %228 = vst.msk [vmem:[#allocation10] sm:$0xff] %vm227, %v226
    // Predicated region
    $region46: #{tpu_custom_call.1} parent=1 // pred_check
      _
    $region47: #{tpu_custom_call.1} parent=1 // pred_check_branch
      %230 = sbr.rel (0) target = $region49
    $region48: #{tpu_custom_call.1} parent=1 // pred_region
      %232 = vsyncadd [#allocation4], 96
      %s233 = sshll.u32 [#allocation10], 4
      %s234 = int_to_ptr.vmem [resolvable:$true] %s233
      %s235 = sshll.u32 %s7, 4
      %s236 = int_to_ptr.hbm [resolvable:$true] %s235
      %241 = dma.vmem_to_hbm [thread:$0]  %s234, 32, %s236, [#allocation4], 32, 32, 2
    $region49: #{tpu_custom_call.1} parent=1 // pred_fallthru
      _
    // Predicated region
    $region50: #{tpu_custom_call.1} parent=1 // pred_check
      _
    $region51: #{tpu_custom_call.1} parent=1 // pred_check_branch
      %243 = sbr.rel (0) target = $region53
    $region52: #{tpu_custom_call.1} parent=1 // pred_region
      %245 = dma.done [#allocation4], 128
    $region53: #{tpu_custom_call.1} parent=1 // pred_fallthru
      _
    %246 = vsyncpa [#allocation3], 1
    %247 = vsyncpa [#allocation6], 1
    %248 = vsyncpa [#allocation9], 1
    %249 = vsyncpa [#allocation4], 1

</llo_original>
